<compile_context>
chip_gen: v7x
topology: tpu7x:2x2x1
jax: 0.10.0
libtpu: 0.0.40
codegen_flags: <defaults>
</compile_context>

<pallas_src>
import jax
import jax.numpy as jnp
from jax.experimental import pallas as pl
from jax.experimental.pallas import tpu as pltpu


def _round_up(n, m):
    return ((n + m - 1) // m) * m


def _choose_batch_tile(B, d_in):
    """Rows per grid step, sized so each x block is ~2 MiB of HBM traffic."""
    target_block_bytes = 2 * 1024 * 1024
    tb = max(512, target_block_bytes // (4 * d_in))
    # Keep double-buffered x comfortably inside v5e's 16 MiB default scoped VMEM.
    vmem_x_budget = 8 * 1024 * 1024
    tb = min(tb, vmem_x_budget // (2 * 4 * d_in))
    # Keep >=4 grid steps when B allows it so v7x's two TensorCores both get work.
    tb = min(tb, _round_up(pl.cdiv(B, 4), 8))
    # Block shape must be a sublane multiple (8 rows for f32).
    tb = max(8, (tb // 8) * 8)
    return int(tb)


def mlp_kernel(x_ref, w1_ref, b1_ref, w2_ref, b2_ref, w3_ref, b3_ref, o_ref):
    # fc1 + ReLU  (MXU, f32 accumulate)
    h1 = jnp.dot(x_ref[...], w1_ref[...], preferred_element_type=jnp.float32)
    h1 = jnp.maximum(h1 + b1_ref[...], 0.0)
    # fc2 + ReLU  (MXU)
    h2 = jnp.dot(h1, w2_ref[...], preferred_element_type=jnp.float32)
    h2 = jnp.maximum(h2 + b2_ref[...], 0.0)
    # fc3 has a single output column: an MXU matmul would fill 1/256 of the
    # output columns and add another dependent MXU drain.  Do it on the VPU
    # (broadcast multiply) + XLU (lane reduction) instead — those slots are idle.
    logit = jnp.sum(h2 * w3_ref[...], axis=-1, keepdims=True) + b3_ref[0, 0]
    # sigmoid(z) = 0.5*tanh(z/2) + 0.5: single EUP op, no exp(-z) overflow,
    # result provably inside [0, 1].
    o_ref[...] = 0.5 * jnp.tanh(0.5 * logit) + 0.5


def binary_classifier_forward(x, params, *, batch_tile=None):
    """x: (B, hidden*num_layers_decoder) f32 -> (B, 1) f32."""
    w1, b1, w2, b2, w3, b3 = params
    B, d_in = x.shape
    H = w1.shape[1]

    TB = batch_tile if batch_tile is not None else _choose_batch_tile(B, d_in)
    grid = (pl.cdiv(B, TB),)

    # fc3 weight presented as a (1, H) row for the in-kernel VPU broadcast.
    w3_row = w3.reshape(1, H)
    # fc3 bias as a scalar in SMEM.
    b3_scalar = b3.reshape(1, 1)

    # VMEM footprint estimate (double-buffered x/out blocks + weights) used to
    # guard the larger tiles on v5e (16 MiB default scoped limit) without ever
    # exceeding v7x's 64 MiB physical VMEM.
    vmem_bytes = 4 * (2 * TB * (d_in + 1) + 2 * (d_in * H + H * H + 3 * H + 1))
    vmem_limit = int(min(64 * 1024 * 1024, max(2 * vmem_bytes, 16 * 1024 * 1024)))

    flops = 2 * B * (d_in * H + H * H + H)
    bytes_accessed = 4 * (B * d_in + d_in * H + H * H + 3 * H + 1 + B)

    out = pl.pallas_call(
        mlp_kernel,
        out_shape=jax.ShapeDtypeStruct((B, 1), jnp.float32),
        grid=grid,
        in_specs=[
            pl.BlockSpec((TB, d_in), lambda i: (i, 0)),   # x: streamed over B
            pl.BlockSpec((d_in, H), lambda i: (0, 0)),    # w1: resident
            pl.BlockSpec((1, H), lambda i: (0, 0)),       # b1
            pl.BlockSpec((H, H), lambda i: (0, 0)),       # w2: resident
            pl.BlockSpec((1, H), lambda i: (0, 0)),       # b2
            pl.BlockSpec((1, H), lambda i: (0, 0)),       # w3 row
            pl.BlockSpec(memory_space=pltpu.SMEM),        # b3 scalar in SMEM
        ],
        # (TB, 1) output block: masked stores, but the store path only moves
        # 4*TB bytes/step (read side moves 4*d_in*TB), so lane-dense output is
        # deferred until profiling shows the epilogue on the critical path.
        out_specs=pl.BlockSpec((TB, 1), lambda i: (i, 0)),
        compiler_params=pltpu.CompilerParams(
            # Parallel batch axis -> sharded across both TensorCores on v7x.
            dimension_semantics=("parallel",),
            vmem_limit_bytes=vmem_limit,
        ),
        cost_estimate=pl.CostEstimate(
            flops=flops, transcendentals=B, bytes_accessed=bytes_accessed),
    )(x, w1, b1, w2, b2, w3_row, b3_scalar)
    return out


def init_params(key, hidden_size, num_layers_decoder):
    """Deterministic init mirroring PyTorch nn.Linear default U(-1/sqrt(fan_in), 1/sqrt(fan_in))."""
    d_in = hidden_size * num_layers_decoder
    keys = jax.random.split(key, 6)

    def lin(kw, kb, fan_in, fan_out):
        bound = 1.0 / jnp.sqrt(jnp.float32(fan_in))
        # Weights stored (fan_in, fan_out) so the kernel computes x @ W directly
        # (equivalent to PyTorch's x @ W.T with W of shape (fan_out, fan_in)).
        w = jax.random.uniform(kw, (fan_in, fan_out), jnp.float32, -bound, bound)
        b = jax.random.uniform(kb, (1, fan_out), jnp.float32, -bound, bound)
        return w, b

    w1, b1 = lin(keys[0], keys[1], d_in, hidden_size)
    w2, b2 = lin(keys[2], keys[3], hidden_size, hidden_size)
    w3, b3 = lin(keys[4], keys[5], hidden_size, 1)
    return (w1, b1, w2, b2, w3, b3)


def _ref_forward(x, params):
    w1, b1, w2, b2, w3, b3 = params
    h1 = jnp.maximum(x @ w1 + b1, 0.0)
    h2 = jnp.maximum(h1 @ w2 + b2, 0.0)
    return jax.nn.sigmoid(h2 @ w3 + b3)


if __name__ == "__main__":
    hidden_size = 32
    num_layers_decoder = 2
    batch = 8

    key = jax.random.PRNGKey(0)
    k_params, k_x, k_x2 = jax.random.split(key, 3)
    params = init_params(k_params, hidden_size, num_layers_decoder)

    # Small production-like shape: single grid step.
    x = jax.random.normal(k_x, (batch, hidden_size * num_layers_decoder), jnp.float32)
    out = binary_classifier_forward(x, params)
    jax.block_until_ready(out)
    assert out.shape == (batch, 1)
    assert jnp.allclose(out, _ref_forward(x, params), atol=1e-5), "mismatch vs reference (small)"
    assert jnp.all(out >= 0.0) and jnp.all(out <= 1.0)

    # Ragged multi-tile batch: exercises cdiv grid + masked partial last block
    # (no wrapper-side pad of x).
    xb = jax.random.normal(k_x2, (1000, hidden_size * num_layers_decoder), jnp.float32)
    outb = binary_classifier_forward(xb, params)
    jax.block_until_ready(outb)
    assert outb.shape == (1000, 1)
    assert jnp.allclose(outb, _ref_forward(xb, params), atol=1e-5), "mismatch vs reference (ragged)"

    print("KERNEL_OK")
</pallas_src>

<mosaic_0001>
module attributes {stable_mosaic.version = 11 : i64} {
  func.func @mlp_kernel(%arg0: i32, %arg1: memref<8x64xf32, #tpu.memory_space<vmem>>, %arg2: memref<64x32xf32, #tpu.memory_space<vmem>>, %arg3: memref<1x32xf32, #tpu.memory_space<vmem>>, %arg4: memref<32x32xf32, #tpu.memory_space<vmem>>, %arg5: memref<1x32xf32, #tpu.memory_space<vmem>>, %arg6: memref<1x32xf32, #tpu.memory_space<vmem>>, %arg7: memref<1x1xf32, #tpu.memory_space<smem>>, %arg8: memref<8x1xf32, #tpu.memory_space<vmem>>) attributes {dimension_semantics = [#tpu.dimension_semantics<parallel>], iteration_bounds = array<i64: 1>, scalar_prefetch = 0 : i64, scratch_operands = 0 : i64, tpu.core_type = #tpu.core_type<tc>, window_params = [{transform_indices = @transform_0, window_bounds = array<i64: 8, 64>}, {pipeline_mode = #tpu.pipeline_mode<synchronous>, transform_indices = @transform_1, window_bounds = array<i64: 64, 32>}, {pipeline_mode = #tpu.pipeline_mode<synchronous>, transform_indices = @transform_2, window_bounds = array<i64: 1, 32>}, {pipeline_mode = #tpu.pipeline_mode<synchronous>, transform_indices = @transform_3, window_bounds = array<i64: 32, 32>}, {pipeline_mode = #tpu.pipeline_mode<synchronous>, transform_indices = @transform_4, window_bounds = array<i64: 1, 32>}, {pipeline_mode = #tpu.pipeline_mode<synchronous>, transform_indices = @transform_5, window_bounds = array<i64: 1, 32>}, {transform_indices = @transform_6, window_bounds = array<i64: 1, 1>}, {transform_indices = @transform_7, window_bounds = array<i64: 8, 1>}]} {
    %c0 = arith.constant 0 : index
    %c0_0 = arith.constant 0 : index
    %0 = vector.load %arg1[%c0, %c0_0] : memref<8x64xf32, #tpu.memory_space<vmem>>, vector<8x64xf32>
    %c0_1 = arith.constant 0 : index
    %c0_2 = arith.constant 0 : index
    %1 = vector.load %arg2[%c0_1, %c0_2] : memref<64x32xf32, #tpu.memory_space<vmem>>, vector<64x32xf32>
    %cst = arith.constant dense<0.000000e+00> : vector<8x32xf32>
    %2 = tpu.matmul %0, %1, %cst {dimension_numbers = #tpu.dot_dimension_numbers<[1], [0], [0], [1], [0, 0, 1, 1], [], []>} : vector<8x64xf32>, vector<64x32xf32>, vector<8x32xf32> -> vector<8x32xf32>
    %c0_3 = arith.constant 0 : index
    %c0_4 = arith.constant 0 : index
    %3 = vector.load %arg3[%c0_3, %c0_4] : memref<1x32xf32, #tpu.memory_space<vmem>>, vector<1x32xf32>
    %4 = vector.broadcast %3 : vector<1x32xf32> to vector<8x32xf32>
    %5 = arith.addf %2, %4 : vector<8x32xf32>
    %cst_5 = arith.constant 0.000000e+00 : f32
    %6 = vector.broadcast %cst_5 : f32 to vector<8x32xf32>
    %7 = arith.maximumf %5, %6 : vector<8x32xf32>
    %c0_6 = arith.constant 0 : index
    %c0_7 = arith.constant 0 : index
    %8 = vector.load %arg4[%c0_6, %c0_7] : memref<32x32xf32, #tpu.memory_space<vmem>>, vector<32x32xf32>
    %cst_8 = arith.constant dense<0.000000e+00> : vector<8x32xf32>
    %9 = tpu.matmul %7, %8, %cst_8 {dimension_numbers = #tpu.dot_dimension_numbers<[1], [0], [0], [1], [0, 0, 1, 1], [], []>} : vector<8x32xf32>, vector<32x32xf32>, vector<8x32xf32> -> vector<8x32xf32>
    %c0_9 = arith.constant 0 : index
    %c0_10 = arith.constant 0 : index
    %10 = vector.load %arg5[%c0_9, %c0_10] : memref<1x32xf32, #tpu.memory_space<vmem>>, vector<1x32xf32>
    %11 = vector.broadcast %10 : vector<1x32xf32> to vector<8x32xf32>
    %12 = arith.addf %9, %11 : vector<8x32xf32>
    %cst_11 = arith.constant 0.000000e+00 : f32
    %13 = vector.broadcast %cst_11 : f32 to vector<8x32xf32>
    %14 = arith.maximumf %12, %13 : vector<8x32xf32>
    %c0_12 = arith.constant 0 : index
    %c0_13 = arith.constant 0 : index
    %15 = vector.load %arg6[%c0_12, %c0_13] : memref<1x32xf32, #tpu.memory_space<vmem>>, vector<1x32xf32>
    %16 = vector.broadcast %15 : vector<1x32xf32> to vector<8x32xf32>
    %17 = arith.mulf %14, %16 : vector<8x32xf32>
    %cst_14 = arith.constant dense<0.000000e+00> : vector<8xf32>
    %18 = vector.multi_reduction <add>, %17, %cst_14 [1] : vector<8x32xf32> to vector<8xf32>
    %19 = vector.shape_cast %18 : vector<8xf32> to vector<8x1xf32>
    %c0_15 = arith.constant 0 : index
    %c0_16 = arith.constant 0 : index
    %20 = memref.load %arg7[%c0_15, %c0_16] : memref<1x1xf32, #tpu.memory_space<smem>>
    %21 = vector.broadcast %20 : f32 to vector<8x1xf32>
    %22 = arith.addf %19, %21 : vector<8x1xf32>
    %cst_17 = arith.constant 5.000000e-01 : f32
    %23 = vector.broadcast %cst_17 : f32 to vector<8x1xf32>
    %24 = arith.mulf %23, %22 : vector<8x1xf32>
    %25 = math.tanh %24 : vector<8x1xf32>
    %cst_18 = arith.constant 5.000000e-01 : f32
    %26 = vector.broadcast %cst_18 : f32 to vector<8x1xf32>
    %27 = arith.mulf %26, %25 : vector<8x1xf32>
    %cst_19 = arith.constant 5.000000e-01 : f32
    %28 = vector.broadcast %cst_19 : f32 to vector<8x1xf32>
    %29 = arith.addf %27, %28 : vector<8x1xf32>
    %c0_20 = arith.constant 0 : index
    %c0_21 = arith.constant 0 : index
    %30 = vector.load %arg8[%c0_20, %c0_21] : memref<8x1xf32, #tpu.memory_space<vmem>>, vector<8x1xf32>
    tpu.vector_store %arg8[%c0_20, %c0_21], %29 {strides = array<i32>} : memref<8x1xf32, #tpu.memory_space<vmem>>, vector<8x1xf32>,
    return
  }
  func.func @transform_0(%arg0: i32) -> (i32, i32) {
    %c0_i32 = arith.constant 0 : i32
    %c0_i32_0 = arith.constant 0 : i32
    return %arg0, %c0_i32 : i32, i32
  }
  func.func @transform_1(%arg0: i32) -> (i32, i32) {
    %c0_i32 = arith.constant 0 : i32
    %c0_i32_0 = arith.constant 0 : i32
    %c0_i32_1 = arith.constant 0 : i32
    return %c0_i32, %c0_i32_0 : i32, i32
  }
  func.func @transform_2(%arg0: i32) -> (i32, i32) {
    %c0_i32 = arith.constant 0 : i32
    %c0_i32_0 = arith.constant 0 : i32
    %c0_i32_1 = arith.constant 0 : i32
    return %c0_i32, %c0_i32_0 : i32, i32
  }
  func.func @transform_3(%arg0: i32) -> (i32, i32) {
    %c0_i32 = arith.constant 0 : i32
    %c0_i32_0 = arith.constant 0 : i32
    %c0_i32_1 = arith.constant 0 : i32
    return %c0_i32, %c0_i32_0 : i32, i32
  }
  func.func @transform_4(%arg0: i32) -> (i32, i32) {
    %c0_i32 = arith.constant 0 : i32
    %c0_i32_0 = arith.constant 0 : i32
    %c0_i32_1 = arith.constant 0 : i32
    return %c0_i32, %c0_i32_0 : i32, i32
  }
  func.func @transform_5(%arg0: i32) -> (i32, i32) {
    %c0_i32 = arith.constant 0 : i32
    %c0_i32_0 = arith.constant 0 : i32
    %c0_i32_1 = arith.constant 0 : i32
    return %c0_i32, %c0_i32_0 : i32, i32
  }
  func.func @transform_6(%arg0: i32) -> (i32, i32) {
    %c0_i32 = arith.constant 0 : i32
    %c0_i32_0 = arith.constant 0 : i32
    %c0_i32_1 = arith.constant 0 : i32
    return %c0_i32, %c0_i32_0 : i32, i32
  }
  func.func @transform_7(%arg0: i32) -> (i32, i32) {
    %c0_i32 = arith.constant 0 : i32
    %c0_i32_0 = arith.constant 0 : i32
    return %arg0, %c0_i32 : i32, i32
  }
}

</mosaic_0001>

<llo_original>
// kernel: tpu_custom_call.1
$region0: #{tpu_custom_call.1}
  #allocation0 [shape = 'u32[]', space=smem, size = 0x4, offset = 0x4, fixed_abs, tag = 'smem constant byte address 0x4 - core index']
  #allocation1 [shape = 'u32[144,128]{1,0:T(1,128)}', space=vmem, size = 0x12000, scoped, tag = 'internal scratch']
  #allocation2 [shape = 'f32[1,1]{1,0:T(1,128)S(6)}', space=smem, size = 0x200, scoped, tag = 'scoped memory for tpu_custom_call.1']
  %s0 = inlined_call_operand.vmem [shape: f32[8,64], index: 0, kind: input, shape index: {}]
  %s1 = inlined_call_operand.vmem [shape: f32[64,32], index: 1, kind: input, shape index: {}]
  %s2 = inlined_call_operand.vmem [shape: f32[1,32], index: 2, kind: input, shape index: {}]
  %s3 = inlined_call_operand.vmem [shape: f32[32,32], index: 3, kind: input, shape index: {}]
  %s4 = inlined_call_operand.vmem [shape: f32[1,32], index: 4, kind: input, shape index: {}]
  %s5 = inlined_call_operand.vmem [shape: f32[1,32], index: 5, kind: input, shape index: {}]
  %s6 = inlined_call_operand.<no memory space> [shape: f32[1,1], index: 6, kind: input, shape index: {}]
  %s7 = inlined_call_operand.vmem [shape: f32[8,1], index: 7, kind: output, shape index: {}]
  %s8 = sld [smem:[#allocation0]]
  $region38: #{tpu_custom_call.1} parent=0
    _
  %s10 = ssub.s32 1, %s8
  %s11 = scalar_select 0, %s10, %s8
  %12 = sst [smem:[#allocation2]] %s6
  // Predicated region
  $region2: #{tpu_custom_call.1} parent=0 // pred_check
    _
  $region3: #{tpu_custom_call.1} parent=0 // pred_check_branch
    %14 = sbr.rel (0) target = $region5
  $region4: #{tpu_custom_call.1} parent=0 // pred_region
    _
  $region5: #{tpu_custom_call.1} parent=0 // pred_fallthru
    _
  // Predicated region
  $region6: #{tpu_custom_call.1} parent=0 // pred_check
    _
  $region7: #{tpu_custom_call.1} parent=0 // pred_check_branch
    %16 = sbr.rel (0) target = $region9
  $region8: #{tpu_custom_call.1} parent=0 // pred_region
    _
  $region9: #{tpu_custom_call.1} parent=0 // pred_fallthru
    _
  // Predicated region
  $region10: #{tpu_custom_call.1} parent=0 // pred_check
    _
  $region11: #{tpu_custom_call.1} parent=0 // pred_check_branch
    %18 = sbr.rel (0) target = $region13
  $region12: #{tpu_custom_call.1} parent=0 // pred_region
    _
  $region13: #{tpu_custom_call.1} parent=0 // pred_fallthru
    _
  // Predicated region
  $region14: #{tpu_custom_call.1} parent=0 // pred_check
    _
  $region15: #{tpu_custom_call.1} parent=0 // pred_check_branch
    %20 = sbr.rel (0) target = $region17
  $region16: #{tpu_custom_call.1} parent=0 // pred_region
    _
  $region17: #{tpu_custom_call.1} parent=0 // pred_fallthru
    _
  // Predicated region
  $region18: #{tpu_custom_call.1} parent=0 // pred_check
    _
  $region19: #{tpu_custom_call.1} parent=0 // pred_check_branch
    %22 = sbr.rel (0) target = $region21
  $region20: #{tpu_custom_call.1} parent=0 // pred_region
    _
  $region21: #{tpu_custom_call.1} parent=0 // pred_fallthru
    _
  // Predicated region
  $region22: #{tpu_custom_call.1} parent=0 // pred_check
    _
  $region23: #{tpu_custom_call.1} parent=0 // pred_check_branch
    %24 = sbr.rel (0) target = $region25
  $region24: #{tpu_custom_call.1} parent=0 // pred_region
    _
  $region25: #{tpu_custom_call.1} parent=0 // pred_fallthru
    _
  // Predicated region
  $region26: #{tpu_custom_call.1} parent=0 // pred_check
    _
  $region27: #{tpu_custom_call.1} parent=0 // pred_check_branch
    %26 = sbr.rel (0) target = $region29
  $region28: #{tpu_custom_call.1} parent=0 // pred_region
    _
  $region29: #{tpu_custom_call.1} parent=0 // pred_fallthru
    _
  %v27 = vld [vmem:[%s0] sm:$0xff]
  %v28 = vld [vmem:[%s1] sm:$0xff]
  %v29 = vld [vmem:[%s1 + $0x8] sm:$0xff]
  %v30 = vld [vmem:[%s1 + $0x10] sm:$0xff]
  %v31 = vld [vmem:[%s1 + $0x18] sm:$0xff]
  %v32 = vld [vmem:[%s1 + $0x20] sm:$0xff]
  %v33 = vld [vmem:[%s1 + $0x28] sm:$0xff]
  %v34 = vld [vmem:[%s1 + $0x30] sm:$0xff]
  %v35 = vld [vmem:[%s1 + $0x38] sm:$0xff]
  %v36 = vld [vmem:[%s2] sm:$0x1]
  %v38 = vlaneseq
  %v39 = vshrl.u32 %v38, 7
  %v40 = vsub.s32 0, %v39
  %v41 = vrot.slane %v36, %v40
  %vm43 = vcmask 523264
  %v45 = vsel %vm43, %v27, 0
  %47 = vmatprep.subr.mxu0 0.0
  %48 = vmatpush1.msra.mxu0 %v28
  %49 = vmatprep.subr.mxu0 0.0
  %50 = vmatpush1.msra.mxu0 %v29
  %51 = vmatprep.subr.mxu0 0.0
  %52 = vmatpush1.msra.mxu0 %v30
  %53 = vmatprep.subr.mxu0 0.0
  %54 = vmatpush1.msra.mxu0 %v31
  %55 = vmatprep.subr.mxu0 0.0
  %56 = vmatpush1.msra.mxu0 %v32
  %57 = vmatprep.subr.mxu0 0.0
  %58 = vmatpush1.msra.mxu0 %v33
  %59 = vmatprep.subr.mxu0 0.0
  %60 = vmatpush1.msra.mxu0 %v34
  %61 = vmatprep.subr.mxu0 0.0
  %62 = vmatpush1.msra.mxu0 %v35
  %63 = vmatprep.subr.mxu0 0.0
  %64 = vmatpush1.msra.mxu0 0.0
  %65 = vmatprep.subr.mxu0 0.0
  %66 = vmatpush1.msra.mxu0 0.0
  %67 = vmatprep.subr.mxu0 0.0
  %68 = vmatpush1.msra.mxu0 0.0
  %69 = vmatprep.subr.mxu0 0.0
  %70 = vmatpush1.msra.mxu0 0.0
  %71 = vmatprep.subr.mxu0 0.0
  %72 = vmatpush1.msra.mxu0 0.0
  %73 = vmatprep.subr.mxu0 0.0
  %74 = vmatpush1.msra.mxu0 0.0
  %75 = vmatprep.subr.mxu0 0.0
  %76 = vmatpush1.msra.mxu0 0.0
  %77 = vmatprep.subr.mxu0 0.0
  %78 = vmatpush1.msra.mxu0 0.0
  %79 = vmatprep.subr.mxu0 0.0
  %80 = vmatpush1.msra.mxu0 0.0
  %81 = vmatprep.subr.mxu0 0.0
  %82 = vmatpush1.msra.mxu0 0.0
  %83 = vmatprep.subr.mxu0 0.0
  %84 = vmatpush1.msra.mxu0 0.0
  %85 = vmatprep.subr.mxu0 0.0
  %86 = vmatpush1.msra.mxu0 0.0
  %87 = vmatprep.subr.mxu0 0.0
  %88 = vmatpush1.msra.mxu0 0.0
  %89 = vmatprep.subr.mxu0 0.0
  %90 = vmatpush1.msra.mxu0 0.0
  %91 = vmatprep.subr.mxu0 0.0
  %92 = vmatpush1.msra.mxu0 0.0
  %93 = vmatprep.subr.mxu0 0.0
  %94 = vmatpush1.msra.mxu0 0.0
  %95 = vmatprep.subr.mxu0 0.0
  %96 = vmatpush1.msra.mxu0 0.0
  %97 = vmatprep.subr.mxu0 0.0
  %98 = vmatpush1.msra.mxu0 0.0
  %99 = vmatprep.subr.mxu0 0.0
  %100 = vmatpush1.msra.mxu0 0.0
  %101 = vmatprep.subr.mxu0 0.0
  %102 = vmatpush1.msra.mxu0 0.0
  %103 = vmatprep.subr.mxu0 0.0
  %104 = vmatpush1.msra.mxu0 0.0
  %105 = vmatprep.subr.mxu0 0.0
  %106 = vmatpush1.msra.mxu0 0.0
  %107 = vmatprep.subr.mxu0 0.0
  %108 = vmatpush1.msra.mxu0 0.0
  %109 = vmatprep.subr.mxu0 0.0
  %110 = vmatpush1.msra.mxu0 0.0
  %111 = vmatprep.mubr.f32.mxu0 0.0
  %112 = vmatmul.mubr.f32.gmra.mrb[0].mxu0 %v45
  %v113 = vpop.f32.mrb[0].mxu0
  %v114 = vadd.f32 %v41, %v113
  %v115 = vpop.f32.mrb[0].mxu0
  %116 = vdwg.mxu0
  %v117 = vmax.f32 %v114, 0.0
  %v118 = vld [vmem:[%s3] sm:$0xff]
  %v119 = vld [vmem:[%s3 + $0x8] sm:$0xff]
  %v120 = vld [vmem:[%s3 + $0x10] sm:$0xff]
  %v121 = vld [vmem:[%s3 + $0x18] sm:$0xff]
  %v122 = vld [vmem:[%s4] sm:$0x1]
  %v124 = vlaneseq
  %v125 = vshrl.u32 %v124, 7
  %v126 = vsub.s32 0, %v125
  %v127 = vrot.slane %v122, %v126
  %vm129 = vcmask 261120
  %v131 = vsel %vm129, %v117, 0
  %133 = vmatprep.subr.mxu0 0.0
  %134 = vmatpush1.msra.mxu0 %v118
  %135 = vmatprep.subr.mxu0 0.0
  %136 = vmatpush1.msra.mxu0 %v119
  %137 = vmatprep.subr.mxu0 0.0
  %138 = vmatpush1.msra.mxu0 %v120
  %139 = vmatprep.subr.mxu0 0.0
  %140 = vmatpush1.msra.mxu0 %v121
  %141 = vmatprep.subr.mxu0 0.0
  %142 = vmatpush1.msra.mxu0 0.0
  %143 = vmatprep.subr.mxu0 0.0
  %144 = vmatpush1.msra.mxu0 0.0
  %145 = vmatprep.subr.mxu0 0.0
  %146 = vmatpush1.msra.mxu0 0.0
  %147 = vmatprep.subr.mxu0 0.0
  %148 = vmatpush1.msra.mxu0 0.0
  %149 = vmatprep.subr.mxu0 0.0
  %150 = vmatpush1.msra.mxu0 0.0
  %151 = vmatprep.subr.mxu0 0.0
  %152 = vmatpush1.msra.mxu0 0.0
  %153 = vmatprep.subr.mxu0 0.0
  %154 = vmatpush1.msra.mxu0 0.0
  %155 = vmatprep.subr.mxu0 0.0
  %156 = vmatpush1.msra.mxu0 0.0
  %157 = vmatprep.subr.mxu0 0.0
  %158 = vmatpush1.msra.mxu0 0.0
  %159 = vmatprep.subr.mxu0 0.0
  %160 = vmatpush1.msra.mxu0 0.0
  %161 = vmatprep.subr.mxu0 0.0
  %162 = vmatpush1.msra.mxu0 0.0
  %163 = vmatprep.subr.mxu0 0.0
  %164 = vmatpush1.msra.mxu0 0.0
  %165 = vmatprep.subr.mxu0 0.0
  %166 = vmatpush1.msra.mxu0 0.0
  %167 = vmatprep.subr.mxu0 0.0
  %168 = vmatpush1.msra.mxu0 0.0
  %169 = vmatprep.subr.mxu0 0.0
  %170 = vmatpush1.msra.mxu0 0.0
  %171 = vmatprep.subr.mxu0 0.0
  %172 = vmatpush1.msra.mxu0 0.0
  %173 = vmatprep.subr.mxu0 0.0
  %174 = vmatpush1.msra.mxu0 0.0
  %175 = vmatprep.subr.mxu0 0.0
  %176 = vmatpush1.msra.mxu0 0.0
  %177 = vmatprep.subr.mxu0 0.0
  %178 = vmatpush1.msra.mxu0 0.0
  %179 = vmatprep.subr.mxu0 0.0
  %180 = vmatpush1.msra.mxu0 0.0
  %181 = vmatprep.subr.mxu0 0.0
  %182 = vmatpush1.msra.mxu0 0.0
  %183 = vmatprep.subr.mxu0 0.0
  %184 = vmatpush1.msra.mxu0 0.0
  %185 = vmatprep.subr.mxu0 0.0
  %186 = vmatpush1.msra.mxu0 0.0
  %187 = vmatprep.subr.mxu0 0.0
  %188 = vmatpush1.msra.mxu0 0.0
  %189 = vmatprep.subr.mxu0 0.0
  %190 = vmatpush1.msra.mxu0 0.0
  %191 = vmatprep.subr.mxu0 0.0
  %192 = vmatpush1.msra.mxu0 0.0
  %193 = vmatprep.subr.mxu0 0.0
  %194 = vmatpush1.msra.mxu0 0.0
  %195 = vmatprep.subr.mxu0 0.0
  %196 = vmatpush1.msra.mxu0 0.0
  %197 = vmatprep.mubr.f32.mxu0 0.0
  %198 = vmatmul.mubr.f32.gmra.mrb[0].mxu0 %v131
  %v199 = vpop.f32.mrb[0].mxu0
  %v200 = vadd.f32 %v127, %v199
  %v201 = vpop.f32.mrb[0].mxu0
  %202 = vdwg.mxu0
  %v203 = vmax.f32 %v200, 0.0
  %v204 = vld [vmem:[%s5] sm:$0x1]
  %v206 = vlaneseq
  %v207 = vshrl.u32 %v206, 7
  %v208 = vsub.s32 0, %v207
  %v209 = vrot.slane %v204, %v208
  %v211 = vmul.f32 %v203, %v209
  %v212 = vsel %vm129, %v211, 0.0
  %213 = vadd.xlane.f32.xlu0 %v212
  %v214 = vpop.xlane.xlu0 %213
  %s215 = sld [smem:[#allocation2]]
  %v216 = vstv %s215
  %v217 = vadd.f32 %v214, %v216
  %v218 = vmul.f32 %v217, 0.5
  %v219 = vtanh.pop %v218
  %v220 = vmul.f32 %v219, 0.5
  %v221 = vadd.f32 %v220, 0.5
  %vm222 = vcmask 7168
  %223 = vst.msk [vmem:[%s7] sm:$0xff] %vm222, %v221
  // Predicated region
  $region30: #{tpu_custom_call.1} parent=0 // pred_check
    _
  $region31: #{tpu_custom_call.1} parent=0 // pred_check_branch
    %225 = sbr.rel (0) target = $region33
  $region32: #{tpu_custom_call.1} parent=0 // pred_region
    _
  $region33: #{tpu_custom_call.1} parent=0 // pred_fallthru
    _
  // Predicated region
  $region34: #{tpu_custom_call.1} parent=0 // pred_check
    _
  $region35: #{tpu_custom_call.1} parent=0 // pred_check_branch
    %227 = sbr.rel (0) target = $region37
  $region36: #{tpu_custom_call.1} parent=0 // pred_region
    _
  $region37: #{tpu_custom_call.1} parent=0 // pred_fallthru
    _

</llo_original>
